<compile_context>
chip_gen: v7x
topology: tpu7x:2x2x1
jax: 0.10.0
libtpu: 0.0.40
codegen_flags: <defaults>
</compile_context>

<pallas_src>
import functools

import numpy as np
import jax
import jax.numpy as jnp
from jax import lax
from jax.experimental import pallas as pl
from jax.experimental.pallas import tpu as pltpu


def _round_up(x, m):
    return (x + m - 1) // m * m


# ----------------------- roll-direction calibration -------------------------
# One tiny eager probe so the kernel is correct regardless of the rotate-
# direction convention of pltpu.roll on the installed JAX/Mosaic version.
# TODO(synk): pin the convention per JAX version instead of an eager probe
# (the probe is fragile under AOT / interpret-only environments).

def _roll_probe_kernel(x_ref, o_ref):
    o_ref[...] = pltpu.roll(x_ref[...], shift=1, axis=1)


def _roll_matches_jnp():
    x = jnp.broadcast_to(jnp.arange(128, dtype=jnp.float32), (8, 128))
    y = pl.pallas_call(
        _roll_probe_kernel,
        out_shape=jax.ShapeDtypeStruct((8, 128), jnp.float32),
    )(x)
    # jnp.roll semantics: element i moves to i+1, so out[:, 0] == x[:, -1] == 127.
    return bool(np.asarray(y)[0, 0] == 127.0)


# --------------------- host-side join-divisor fold replay --------------------

def _block_input_scales(num_columns):
    """Multiplier folded into each ConvBlock's weights so that every join()
    divisor on its input disappears from the kernel.  Block order equals the
    parameter-consumption (trace) order of the original recursive forward."""
    scales = []

    def spine(nc, s):
        scales.extend([s] * nc)        # the nc blocks that consume this input
        rest(nc)

    def rest(nc):
        if nc == 1:
            return
        rest(nc - 1)
        spine(nc - 1, 1.0 / (nc - 1))  # inner join of (nc-1) branches

    spine(num_columns, 1.0)
    return scales


# ------------------------------ fused kernel --------------------------------

def _make_fractal_kernel(num_columns, c, wp, pp, kpad, roll_up):
    """Static config: num_columns (fractal depth), c channels (multiple of 8),
    wp = padded row width (W+2), pp = lane-padded per-image flattened length
    (multiple of 128), kpad = contraction dim padded to a multiple of 128."""
    # Tap offsets in flattened (i, j) -> i*wp + j coords, k = dh*3 + dw ordering
    # matching the im2col weight column layout.
    deltas = [(dh - 1) * wp + (dw - 1) for dh in range(3) for dw in range(3)]
    nine_c = 9 * c

    def shift_src(a, d):
        # Returns s with s[:, j] = a[:, (j + d) % pp]  (cyclic lane rotation).
        if d % pp == 0:
            return a
        amt = (-d) % pp if roll_up else d % pp
        return pltpu.roll(a, shift=amt, axis=1)

    def kernel(x_ref, w_ref, b_ref, wt_ref, mask_ref, o_ref, col_ref, acc_ref):
        # x_ref   : (C, Pp)      zero-halo, channels-major, lane-padded image
        # w_ref   : (B*C, kpad)  folded im2col weights, block-index row order
        # b_ref   : (B*C, 1)     folded BatchNorm bias  (eval)
        # wt_ref  : (CT, C)      transition 1x1 conv weight (final join folded)
        # mask_ref: (1, Pp)      1.0 on interior pixels, 0.0 on halo / lane pad
        # o_ref   : (CT, Pp)     2x2-max values (wrapper does strided extraction)
        # col_ref : (kpad, Pp)   VMEM im2col slab (rows 9C..kpad stay zero)
        # acc_ref : (C, Pp)      running final-join accumulator
        mask = mask_ref[...]
        next_idx = [0]

        # Zero the K-pad rows once per step; data rows 0:9C are fully
        # rewritten before every read.
        if kpad > nine_c:
            col_ref[nine_c:kpad, :] = jnp.zeros((kpad - nine_c, pp), jnp.float32)

        def conv_spine(a, nc):
            # All `nc` ConvBlocks that directly consume `a`: ONE shared im2col
            # slab + ONE stacked (nc*C, kpad) x (kpad, Pp) matmul.
            i0 = next_idx[0]
            next_idx[0] += nc
            for k, d in enumerate(deltas):
                col_ref[k * c:(k + 1) * c, :] = shift_src(a, d)
            r0, r1 = i0 * c, (i0 + nc) * c
            y = jnp.dot(w_ref[r0:r1, :], col_ref[...],
                        preferred_element_type=jnp.float32)
            # Folded BN (scale already in W) + ReLU; re-zero halo / lane pad so
            # the cyclic rolls of downstream slabs stay correct.
            y = jnp.maximum(y + b_ref[r0:r1, :], 0.0) * mask
            return [y[k * c:(k + 1) * c, :] for k in range(nc)]

        def frac(nc, a, sink):
            # FractalBlock(nc).forward(a), eval mode, spine-memoized.  Branch
            # outputs are emitted into `sink` in the original trace order.
            spine = conv_spine(a, nc)
            sink(spine[0])
            rest(nc, spine, sink)

        def rest(nc, spine, sink):
            if nc == 1:
                return
            r = [spine[1]]
            rest(nc - 1, spine[1:], r.append)
            jsum = r[0]
            for t in r[1:]:
                jsum = jsum + t          # join divisor folded into consumer W
            frac(nc - 1, jsum, sink)

        first = [True]

        def accumulate(v):               # running final-join accumulator
            if first[0]:
                acc_ref[...] = v
                first[0] = False
            else:
                acc_ref[...] += v

        frac(num_columns, x_ref[...], accumulate)

        # TransitionLayer = Conv2d(1x1, no bias) + MaxPool2d(2, 2).
        # Final join's 1/num_columns is folded into wt.
        z = jnp.dot(wt_ref[...], acc_ref[...], preferred_element_type=jnp.float32)
        zm = jnp.maximum(z, shift_src(z, 1))      # max over (j, j+1)
        zm = jnp.maximum(zm, shift_src(zm, wp))   # max over the full 2x2 window
        o_ref[...] = zm.astype(o_ref.dtype)

    return kernel


# --------------------------------- wrapper ----------------------------------

@functools.partial(jax.jit, static_argnames=("num_columns", "roll_up"))
def fractal_forward(x_nchw, params, *, num_columns, roll_up):
    """FractalBlock forward (test mode). x: (N, C, H, W) NCHW -> (N, CT, H/2, W/2)."""
    n, c, h, w = x_nchw.shape
    assert num_columns >= 2      # TransitionLayer only exists for num_columns > 1
    assert h % 2 == 0 and w % 2 == 0 and c % 8 == 0
    hp, wp = h + 2, w + 2
    hh, wh = h // 2, w // 2
    img = hp * wp                         # flattened padded image length
    pp = _round_up(img, 128)              # lane-padded per-image length
    kpad = _round_up(9 * c, 128)
    ct = params["wt"].shape[0]
    n_blocks = 2 ** num_columns - 1

    # Halo invariant for the cyclic-roll im2col: for every interior pixel j,
    # j + d stays inside [0, img) for all tap offsets |d| <= wp+1, so rolls
    # never wrap valid data; wrapped garbage only lands on halo/pad lanes,
    # which the mask re-zeroes after every ConvBlock.
    assert (h + 1) * wp + w + 1 < img and wp + 1 >= wp + 1

    # Channels-major, per-image lane-padded layout; images concatenated on lanes.
    xp = jnp.pad(x_nchw, ((0, 0), (0, 0), (1, 1), (1, 1)))          # zero halo
    x_flat = xp.transpose(1, 0, 2, 3).reshape(c, n, img)
    x_flat = jnp.pad(x_flat, ((0, 0), (0, 0), (0, pp - img))).reshape(c, n * pp)

    mask_np = np.zeros((hp, wp), np.float32)
    mask_np[1:h + 1, 1:w + 1] = 1.0
    mask = jnp.asarray(np.pad(mask_np.reshape(1, img), ((0, 0), (0, pp - img))))

    kernel = _make_fractal_kernel(num_columns, c, wp, pp, kpad, roll_up)

    flops = n * (2 * (n_blocks * c) * kpad * pp + 2 * ct * c * pp)
    bytes_accessed = 4 * (x_flat.size + params["w_all"].size + params["b_all"].size
                          + params["wt_fold"].size + mask.size + ct * n * pp)

    out = pl.pallas_call(
        kernel,
        out_shape=jax.ShapeDtypeStruct((ct, n * pp), jnp.float32),
        grid_spec=pltpu.PrefetchScalarGridSpec(
            num_scalar_prefetch=0,
            grid=(n,),                                     # one step per image
            in_specs=[
                pl.BlockSpec((c, pp), lambda i: (0, i)),               # x
                pl.BlockSpec((n_blocks * c, kpad), lambda i: (0, 0)),  # w_all
                pl.BlockSpec((n_blocks * c, 1), lambda i: (0, 0)),     # b_all
                pl.BlockSpec((ct, c), lambda i: (0, 0)),               # wt
                pl.BlockSpec((1, pp), lambda i: (0, 0)),               # mask
            ],
            out_specs=pl.BlockSpec((ct, pp), lambda i: (0, i)),
            scratch_shapes=[pltpu.VMEM((kpad, pp), jnp.float32),   # im2col slab
                            pltpu.VMEM((c, pp), jnp.float32)],     # join acc
        ),
        compiler_params=pltpu.CompilerParams(
            dimension_semantics=("parallel",)),
        cost_estimate=pl.CostEstimate(flops=flops, transcendentals=0,
                                      bytes_accessed=bytes_accessed),
    )(x_flat, params["w_all"], params["b_all"], params["wt_fold"], mask)

    # Linear-size strided extraction of the pooled pixels (replaces the old
    # dense (P,Q) 0/1 selection matmul).  Pooled pixel (ri, rj) lives at padded
    # flat position (2*ri+1)*wp + (2*rj+1).
    out = out.reshape(ct, n, pp)[:, :, :img].reshape(ct, n, hp, wp)
    out = out[:, :, 1:h + 1:2, 1:w + 1:2]
    return out.transpose(1, 0, 2, 3)


# ------------------------ parameters (deterministic) -------------------------

def init_params(key, num_columns, c, ct):
    """Params for FractalBlock(num_columns): 2^cols-1 ConvBlocks + 1x1 transition."""
    n_blocks = 2 ** num_columns - 1
    keys = jax.random.split(key, n_blocks + 1)
    eps = 1e-5
    kpad = _round_up(9 * c, 128)
    in_scales = _block_input_scales(num_columns)   # join divisors folded into W
    w_hwio, scale_raw, bias_raw, w_rows, b_rows = [], [], [], [], []
    for i in range(n_blocks):
        kw, kg, kb, km, kv = jax.random.split(keys[i], 5)
        wgt = jax.random.normal(kw, (3, 3, c, c), jnp.float32) / np.sqrt(9 * c)
        gamma = jax.random.uniform(kg, (c,), jnp.float32, 0.5, 1.5)
        beta = 0.1 * jax.random.normal(kb, (c,), jnp.float32)
        rmean = 0.1 * jax.random.normal(km, (c,), jnp.float32)
        rvar = jax.random.uniform(kv, (c,), jnp.float32, 0.5, 1.5)
        scale = gamma / jnp.sqrt(rvar + eps)     # fold eval-mode BN into scale/bias
        bias = beta - rmean * scale
        w_hwio.append(wgt)
        scale_raw.append(scale)
        bias_raw.append(bias)
        wcat = wgt.reshape(9 * c, c).T           # (Cout, 9*Cin), tap-major (dh,dw,ci)
        wrow = (scale[:, None] * wcat) * in_scales[i]   # BN scale + join fold
        w_rows.append(jnp.pad(wrow, ((0, 0), (0, kpad - 9 * c))))   # K pad -> 128
        b_rows.append(bias[:, None])
    wt = jax.random.normal(keys[-1], (ct, c), jnp.float32) / np.sqrt(c)
    return {
        "w_all": jnp.concatenate(w_rows, axis=0),      # (B*C, kpad) folded weights
        "b_all": jnp.concatenate(b_rows, axis=0),      # (B*C, 1)
        "wt_fold": wt / num_columns,                   # final join folded into wt
        "wt": wt,
        # raw copies for the pure-JAX reference
        "w_hwio": w_hwio, "scale_raw": scale_raw, "bias_raw": bias_raw,
    }


# ------------------------- pure-JAX reference check --------------------------

def _ref_forward(params, num_columns, x):
    hi = lax.Precision.HIGHEST
    next_idx = [0]

    def conv_block(a):
        i = next_idx[0]
        next_idx[0] += 1
        y = lax.conv_general_dilated(
            a, params["w_hwio"][i], (1, 1), "SAME",
            dimension_numbers=("NCHW", "HWIO", "NCHW"), precision=hi)
        y = (y * params["scale_raw"][i][None, :, None, None]
             + params["bias_raw"][i][None, :, None, None])
        return jnp.maximum(y, 0.0)

    def join(bs):
        if not isinstance(bs, list):
            return bs
        return sum(bs) / len(bs)

    def fractal(nc, a):
        if nc == 1:
            return conv_block(a)
        a = join(a)
        y1 = conv_block(a)
        y2 = fractal(nc - 1, a)
        y2 = join(y2)
        y2 = fractal(nc - 1, y2)
        return [y1] + y2 if isinstance(y2, list) else [y1, y2]

    j = join(fractal(num_columns, x))
    z = jnp.einsum("nchw,oc->nohw", j, params["wt"], precision=hi)
    nb, ctc, hh, ww = z.shape
    return z.reshape(nb, ctc, hh // 2, 2, ww // 2, 2).max(axis=(3, 5))


# ----------------------------------- main ------------------------------------

if __name__ == "__main__":
    NUM_COLUMNS = 3           # fractal depth -> 7 ConvBlocks + 1 TransitionLayer
    NUM_FEATURES = 8          # in/out channels of every ConvBlock
    OUT_FEATURES = 16         # channels after the transition 1x1 conv
    N, H, W = 2, 16, 16

    root = jax.random.PRNGKey(0)
    kx, kp = jax.random.split(root)
    x = jax.random.normal(kx, (N, NUM_FEATURES, H, W), jnp.float32)  # NCHW (PyTorch)
    params = init_params(kp, NUM_COLUMNS, NUM_FEATURES, OUT_FEATURES)

    roll_up = _roll_matches_jnp()     # calibrate pltpu.roll direction once (eager)

    y = fractal_forward(x, params, num_columns=NUM_COLUMNS, roll_up=roll_up)
    y = jax.block_until_ready(y)
    assert y.shape == (N, OUT_FEATURES, H // 2, W // 2), y.shape

    y_ref = _ref_forward(params, NUM_COLUMNS, x)
    np.testing.assert_allclose(np.asarray(y), np.asarray(y_ref),
                               rtol=2e-4, atol=2e-4)
    print("KERNEL_OK")
</pallas_src>

<mosaic_0001>
module attributes {stable_mosaic.version = 11 : i64} {
  func.func @_roll_probe_kernel(%arg0: memref<8x128xf32, #tpu.memory_space<vmem>>, %arg1: memref<8x128xf32, #tpu.memory_space<vmem>>) attributes {dimension_semantics = [], scalar_prefetch = 0 : i64, scratch_operands = 0 : i64, tpu.core_type = #tpu.core_type<tc>} {
    %c0 = arith.constant 0 : index
    %c0_0 = arith.constant 0 : index
    %0 = vector.load %arg0[%c0, %c0_0] : memref<8x128xf32, #tpu.memory_space<vmem>>, vector<8x128xf32>
    %c1_i32 = arith.constant 1 : i32
    %1 = tpu.dynamic_rotate %0 by %c1_i32 dim 1 : vector<8x128xf32>, i32 -> vector<8x128xf32>
    %c0_1 = arith.constant 0 : index
    %c0_2 = arith.constant 0 : index
    %2 = vector.load %arg1[%c0_1, %c0_2] : memref<8x128xf32, #tpu.memory_space<vmem>>, vector<8x128xf32>
    tpu.vector_store %arg1[%c0_1, %c0_2], %1 {strides = array<i32>} : memref<8x128xf32, #tpu.memory_space<vmem>>, vector<8x128xf32>,
    return
  }
}

</mosaic_0001>

<llo_original>
// kernel: tpu_custom_call.1
$region0: #{tpu_custom_call.1}
  #allocation0 [shape = 'u32[]', space=smem, size = 0x4, offset = 0x4, fixed_abs, tag = 'smem constant byte address 0x4 - core index']
  #allocation1 [shape = 'u32[144,128]{1,0:T(1,128)}', space=vmem, size = 0x12000, scoped, tag = 'internal scratch']
  %s0 = inlined_call_operand.hbm [shape: f32[8,128], index: 0, kind: input, shape index: {}]
  %s1 = inlined_call_operand.hbm [shape: f32[8,128], index: 1, kind: output, shape index: {}]
  %s2 = sld [smem:[#allocation0]]
  $region18: #{tpu_custom_call.1} parent=0
    _
  %s4 = ssub.s32 1, %s2
  %s5 = scalar_select 0, %s4, %s2
  $region1: #{tpu_custom_call.1} parent=0
    #allocation2 [shape = 'u8[4096]{0}', space=vmem, size = 0x1000, scoped, tag = 'input window, operand 0, single buffered']
    #allocation3 [shape = 's32[1]{0}', space=sflag, size = 0x4, scoped, tag = 'scoped memory for tpu_custom_call.1']
    #allocation4 [shape = 's32[1]{0}', space=sflag, size = 0x4, scoped, tag = 'scoped memory for tpu_custom_call.1']
    #allocation5 [shape = 'u8[4096]{0}', space=vmem, size = 0x1000, scoped, tag = 'output window, operand 0, single buffered']
    %6 = vsyncpa [#allocation3], 0
    %7 = vsyncpa [#allocation4], 0
    // Predicated region
    $region2: #{tpu_custom_call.1} parent=1 // pred_check
      _
    $region3: #{tpu_custom_call.1} parent=1 // pred_check_branch
      %9 = sbr.rel (0) target = $region5
    $region4: #{tpu_custom_call.1} parent=1 // pred_region
      %s11 = ssub.s32 128, 128
      %12 = vsyncadd [#allocation3], %s11
      %s14 = sshll.u32 [#allocation2], 4
      %s15 = int_to_ptr.vmem [resolvable:$true] %s14
      %17 = dma.hbm_to_vmem [thread:$0]  %s0, 128, %s15, [#allocation3]
    $region5: #{tpu_custom_call.1} parent=1 // pred_fallthru
      _
    // Predicated region
    $region6: #{tpu_custom_call.1} parent=1 // pred_check
      _
    $region7: #{tpu_custom_call.1} parent=1 // pred_check_branch
      %19 = sbr.rel (0) target = $region9
    $region8: #{tpu_custom_call.1} parent=1 // pred_region
      %20 = dma.done [#allocation3], 128
    $region9: #{tpu_custom_call.1} parent=1 // pred_fallthru
      _
    %v21 = vld [vmem:[#allocation2] sm:$0xff]
    %22 = vrot.lane.b32.xlu0 %v21, 1
    %v23 = vpop.permute.xlu0 %22
    %24 = vst [vmem:[#allocation5] sm:$0xff] %v23
    // Predicated region
    $region10: #{tpu_custom_call.1} parent=1 // pred_check
      _
    $region11: #{tpu_custom_call.1} parent=1 // pred_check_branch
      %26 = sbr.rel (0) target = $region13
    $region12: #{tpu_custom_call.1} parent=1 // pred_region
      %s28 = ssub.s32 128, 128
      %29 = vsyncadd [#allocation4], %s28
      %s31 = sshll.u32 [#allocation5], 4
      %s32 = int_to_ptr.vmem [resolvable:$true] %s31
      %34 = dma.vmem_to_hbm [thread:$0]  %s32, 128, %s1, [#allocation4]
    $region13: #{tpu_custom_call.1} parent=1 // pred_fallthru
      _
    // Predicated region
    $region14: #{tpu_custom_call.1} parent=1 // pred_check
      _
    $region15: #{tpu_custom_call.1} parent=1 // pred_check_branch
      %36 = sbr.rel (0) target = $region17
    $region16: #{tpu_custom_call.1} parent=1 // pred_region
      %37 = dma.done [#allocation4], 128
    $region17: #{tpu_custom_call.1} parent=1 // pred_fallthru
      _
    %38 = vsyncpa [#allocation3], 1
    %39 = vsyncpa [#allocation4], 1

</llo_original>
